<compile_context>
chip_gen: v5e
topology: v5e:2x2
jax: 0.10.0
libtpu: 0.0.40
codegen_flags: <defaults>
</compile_context>

<pallas_src>
import jax
import jax.numpy as jnp
from jax.experimental import pallas as pl
from jax.experimental.pallas import tpu as pltpu

P_DROP = 0.1
_KEEP_SCALE = 1.0 / (1.0 - P_DROP)
# drop iff (23 uniform bits) < threshold  =>  P(drop) = threshold / 2**23
_DROP_THRESHOLD = int(round(P_DROP * (1 << 23)))

# 32-bit mixing constants (signed two's-complement views of the usual unsigned
# hash constants so everything stays in plain int32).
_C_GOLDEN = -1640531527   # 0x9E3779B9
_C_SEED = -2048144789     # 0x85EBCA6B
_C_MIX1 = 2146120045      # 0x7FEB352D
_C_MIX2 = -2073614709     # 0x846CA68B


def _keep_mask(shape, seed, block_id):
    """Stateless per-element Bernoulli(1 - P_DROP) keep mask, int32 ops only."""
    rows = jax.lax.broadcasted_iota(jnp.int32, shape, 0)
    cols = jax.lax.broadcasted_iota(jnp.int32, shape, 1)
    h = rows * jnp.int32(shape[1]) + cols
    h = h + block_id * jnp.int32(_C_GOLDEN) + seed * jnp.int32(_C_SEED)
    # xxhash/murmur-style avalanche; logical right shifts emulated with
    # (arithmetic shift & mask) so only int32 ops are required.
    h = h ^ ((h >> 16) & 0xFFFF)
    h = h * jnp.int32(_C_MIX1)
    h = h ^ ((h >> 15) & 0x1FFFF)
    h = h * jnp.int32(_C_MIX2)
    h = h ^ ((h >> 16) & 0xFFFF)
    r = h & jnp.int32(0x7FFFFF)            # 23 uniform bits, non-negative
    return r >= jnp.int32(_DROP_THRESHOLD)


def _body(bias_ref, x_ref, o_ref, *, seed_ref):
    x = x_ref[...].astype(jnp.float32)      # (TR, S)
    b = bias_ref[...].astype(jnp.float32)   # (1, S) -> broadcast over rows
    s = x + b
    m = jnp.max(s, axis=-1, keepdims=True)
    e = jnp.exp(s - m)
    denom = jnp.sum(e, axis=-1, keepdims=True)
    inv = pl.reciprocal(denom, approx=True)          # EUP slot, ~free when mem-bound
    if seed_ref is None:
        out = e * inv
    else:
        inv = inv * jnp.float32(_KEEP_SCALE)          # fold dropout rescale into inv
        keep = _keep_mask(s.shape, seed_ref[0], pl.program_id(0))
        out = jnp.where(keep, e * inv, jnp.float32(0.0))
    o_ref[...] = out.astype(o_ref.dtype)


def _kernel_train(seed_ref, bias_ref, x_ref, o_ref):
    _body(bias_ref, x_ref, o_ref, seed_ref=seed_ref)


def _kernel_eval(bias_ref, x_ref, o_ref):
    _body(bias_ref, x_ref, o_ref, seed_ref=None)


def _pick_tile_rows(total_rows, target):
    tr = min(target, total_rows)
    if tr == total_rows:
        return tr
    tr -= tr % 8
    while tr > 8 and total_rows % tr != 0:
        tr -= 8
    if tr <= 0 or total_rows % tr != 0:
        return total_rows
    return tr


def add_softmax_dropout(x, bias, seed=None, *, apply_dropout=True,
                        tile_rows=512, out_dtype=None):
    """softmax(x + bias, axis=-1) followed by dropout(p=0.1).

    x    : (B, H, S, S) float32
    bias : (1, 1, 1, S) float32 (the module's _tensor_constant20)
    seed : (1,) int32 scalar-prefetch seed for the dropout mask (train mode).
    out_dtype: defaults to x.dtype (f32, matching the module); pass bfloat16
               to halve output HBM traffic if the consumer tolerates it.
    """
    B, H, S, L = x.shape
    assert bias.shape[-1] == L
    out_dtype = x.dtype if out_dtype is None else jnp.dtype(out_dtype)

    total_rows = B * H * S
    x2 = x.reshape(total_rows, L)                 # free contiguous reshape
    bias2 = bias.reshape(1, L).astype(x.dtype)

    tr = _pick_tile_rows(total_rows, tile_rows)
    grid = (total_rows // tr,)

    bias_spec = pl.BlockSpec((1, L), lambda i, *_: (0, 0))
    x_spec = pl.BlockSpec((tr, L), lambda i, *_: (i, 0))
    out_spec = pl.BlockSpec((tr, L), lambda i, *_: (i, 0))

    elems = total_rows * L
    cost = pl.CostEstimate(
        flops=6 * elems,
        transcendentals=elems,
        bytes_accessed=elems * x.dtype.itemsize
        + elems * out_dtype.itemsize
        + L * bias.dtype.itemsize,
    )
    cparams = pltpu.CompilerParams(dimension_semantics=("parallel",))
    out_shape = jax.ShapeDtypeStruct((total_rows, L), out_dtype)

    if apply_dropout:
        if seed is None:
            seed = jnp.zeros((1,), jnp.int32)
        seed = jnp.asarray(seed, jnp.int32).reshape((1,))
        out2 = pl.pallas_call(
            _kernel_train,
            out_shape=out_shape,
            grid_spec=pltpu.PrefetchScalarGridSpec(
                num_scalar_prefetch=1,            # seed -> SMEM
                grid=grid,
                in_specs=[bias_spec, x_spec],
                out_specs=out_spec,
            ),
            compiler_params=cparams,
            cost_estimate=cost,
        )(seed, bias2, x2)
    else:
        out2 = pl.pallas_call(
            _kernel_eval,
            out_shape=out_shape,
            grid_spec=pltpu.PrefetchScalarGridSpec(
                num_scalar_prefetch=0,            # no unused SMEM prefetch in eval
                grid=grid,
                in_specs=[bias_spec, x_spec],
                out_specs=out_spec,
            ),
            compiler_params=cparams,
            cost_estimate=cost,
        )(bias2, x2)

    return out2.reshape(B, H, S, L)


if __name__ == "__main__":
    # Small shapes consistent with the module's (1, 12, 384, 384) / (1, 1, 1, 384).
    B, H, S = 1, 4, 128

    key = jax.random.PRNGKey(0)
    kx, kb = jax.random.split(key)
    x = jax.random.normal(kx, (B, H, S, S), dtype=jnp.float32)
    bias = jax.random.uniform(kb, (1, 1, 1, S), dtype=jnp.float32)  # torch.rand equivalent
    seed = jnp.array([1234], dtype=jnp.int32)

    # Hot-path numerics check with dropout disabled (deterministic).
    # Tolerance is loosened because the kernel uses the approximate (EUP)
    # reciprocal for the softmax denominator.
    out_eval = add_softmax_dropout(x, bias, apply_dropout=False)
    ref = jax.nn.softmax(x + bias, axis=-1)
    assert jnp.allclose(out_eval, ref, atol=5e-3, rtol=5e-3), "softmax mismatch"

    # Training-mode forward (module default: Dropout(p=0.1) active).  The mask
    # comes from a deterministic in-kernel hash, so exact values differ from
    # torch's RNG stream, but the Bernoulli(0.9) + 1/0.9 rescale semantics match.
    out_train = add_softmax_dropout(x, bias, seed, apply_dropout=True)
    jax.block_until_ready(out_train)
    assert out_train.shape == x.shape
    drop_frac = float(jnp.mean((out_train == 0.0).astype(jnp.float32)))
    assert 0.03 < drop_frac < 0.2, f"unexpected drop fraction: {drop_frac}"

    print("KERNEL_OK")
</pallas_src>

<mosaic_0001>
module attributes {stable_mosaic.version = 11 : i64} {
  func.func @_kernel_eval(%arg0: i32, %arg1: memref<1x128xf32, #tpu.memory_space<vmem>>, %arg2: memref<512x128xf32, #tpu.memory_space<vmem>>, %arg3: memref<512x128xf32, #tpu.memory_space<vmem>>) attributes {dimension_semantics = [#tpu.dimension_semantics<parallel>], iteration_bounds = array<i64: 1>, scalar_prefetch = 0 : i64, scratch_operands = 0 : i64, tpu.core_type = #tpu.core_type<tc>, window_params = [{pipeline_mode = #tpu.pipeline_mode<synchronous>, transform_indices = @transform_0, window_bounds = array<i64: 1, 128>}, {transform_indices = @transform_1, window_bounds = array<i64: 512, 128>}, {transform_indices = @transform_2, window_bounds = array<i64: 512, 128>}]} {
    %c0 = arith.constant 0 : index
    %c0_0 = arith.constant 0 : index
    %0 = vector.load %arg2[%c0, %c0_0] : memref<512x128xf32, #tpu.memory_space<vmem>>, vector<512x128xf32>
    %c0_1 = arith.constant 0 : index
    %c0_2 = arith.constant 0 : index
    %1 = vector.load %arg1[%c0_1, %c0_2] : memref<1x128xf32, #tpu.memory_space<vmem>>, vector<1x128xf32>
    %2 = vector.broadcast %1 : vector<1x128xf32> to vector<512x128xf32>
    %3 = arith.addf %0, %2 : vector<512x128xf32>
    %cst = arith.constant dense<0xFF800000> : vector<512xf32>
    %4 = vector.multi_reduction <maximumf>, %3, %cst [1] : vector<512x128xf32> to vector<512xf32>
    %5 = vector.shape_cast %4 : vector<512xf32> to vector<512x1xf32>
    %6 = vector.broadcast %5 : vector<512x1xf32> to vector<512x128xf32>
    %7 = arith.subf %3, %6 : vector<512x128xf32>
    %8 = math.exp %7 : vector<512x128xf32>
    %cst_3 = arith.constant dense<0.000000e+00> : vector<512xf32>
    %9 = vector.multi_reduction <add>, %8, %cst_3 [1] : vector<512x128xf32> to vector<512xf32>
    %10 = vector.shape_cast %9 : vector<512xf32> to vector<512x1xf32>
    %11 = tpu.reciprocal %10 {approx = true} : vector<512x1xf32> -> vector<512x1xf32>
    %12 = vector.broadcast %11 : vector<512x1xf32> to vector<512x128xf32>
    %13 = arith.mulf %8, %12 : vector<512x128xf32>
    %c0_4 = arith.constant 0 : index
    %c0_5 = arith.constant 0 : index
    %14 = vector.load %arg3[%c0_4, %c0_5] : memref<512x128xf32, #tpu.memory_space<vmem>>, vector<512x128xf32>
    tpu.vector_store %arg3[%c0_4, %c0_5], %13 {strides = array<i32>} : memref<512x128xf32, #tpu.memory_space<vmem>>, vector<512x128xf32>,
    return
  }
  func.func @transform_0(%arg0: i32) -> (i32, i32) {
    %c0_i32 = arith.constant 0 : i32
    %c0_i32_0 = arith.constant 0 : i32
    %c0_i32_1 = arith.constant 0 : i32
    return %c0_i32, %c0_i32_0 : i32, i32
  }
  func.func @transform_1(%arg0: i32) -> (i32, i32) {
    %c0_i32 = arith.constant 0 : i32
    %c0_i32_0 = arith.constant 0 : i32
    return %arg0, %c0_i32 : i32, i32
  }
  func.func @transform_2(%arg0: i32) -> (i32, i32) {
    %c0_i32 = arith.constant 0 : i32
    %c0_i32_0 = arith.constant 0 : i32
    return %arg0, %c0_i32 : i32, i32
  }
}

</mosaic_0001>

<llo_original>
// kernel: tpu_custom_call.1
$region0: #{tpu_custom_call.1}
  #allocation0 [shape = 'u32[]', space=smem, size = 0x4, offset = 0x4, fixed_abs, tag = 'smem constant byte address 0x4 - core index']
  #allocation1 [shape = 'u32[72,128]{1,0:T(1,128)}', space=vmem, size = 0x9000, scoped, tag = 'internal scratch']
  %s0 = inlined_call_operand.hbm [shape: f32[1,128], index: 0, kind: input, shape index: {}]
  %s1 = inlined_call_operand.hbm [shape: f32[512,128], index: 1, kind: input, shape index: {}]
  %s2 = inlined_call_operand.hbm [shape: f32[512,128], index: 2, kind: output, shape index: {}]
  %s3 = sld [smem:[#allocation0]]
  $region26: #{tpu_custom_call.1} parent=0
    _
  %s5 = ssub.s32 1, %s3
  %s6 = scalar_select 0, %s5, %s3
  $region1: #{tpu_custom_call.1} parent=0
    #allocation2 [shape = 'u8[512]{0}', space=vmem, size = 0x400, scoped, tag = 'input window, operand 0, single buffered']
    #allocation3 [shape = 's32[1]{0}', space=sflag, size = 0x4, scoped, tag = 'scoped memory for tpu_custom_call.1']
    #allocation4 [shape = 's32[1]{0}', space=sflag, size = 0x4, scoped, tag = 'scoped memory for tpu_custom_call.1']
    #allocation5 [shape = 'u8[262144]{0}', space=vmem, size = 0x40000, scoped, tag = 'input window, operand 1, single buffered']
    #allocation6 [shape = 's32[1]{0}', space=sflag, size = 0x4, scoped, tag = 'scoped memory for tpu_custom_call.1']
    #allocation7 [shape = 'u8[262144]{0}', space=vmem, size = 0x40000, scoped, tag = 'output window, operand 0, single buffered']
    %7 = vsyncpa [#allocation3], 0
    %8 = vsyncpa [#allocation6], 0
    %9 = vsyncpa [#allocation4], 0
    // Predicated region
    $region2: #{tpu_custom_call.1} parent=1 // pred_check
      _
    $region3: #{tpu_custom_call.1} parent=1 // pred_check_branch
      %11 = sbr.rel (0) target = $region5
    $region4: #{tpu_custom_call.1} parent=1 // pred_region
      %13 = vsyncadd [#allocation3], 0
      %s15 = sshll.u32 %s0, 4
      %s16 = int_to_ptr.hbm [resolvable:$true] %s15
      %s17 = sshll.u32 [#allocation2], 4
      %s18 = int_to_ptr.vmem [resolvable:$true] %s17
      %20 = dma.hbm_to_vmem [thread:$0]  %s16, 16, %s18, [#allocation3]
    $region5: #{tpu_custom_call.1} parent=1 // pred_fallthru
      _
    // Predicated region
    $region6: #{tpu_custom_call.1} parent=1 // pred_check
      _
    $region7: #{tpu_custom_call.1} parent=1 // pred_check_branch
      %22 = sbr.rel (0) target = $region9
    $region8: #{tpu_custom_call.1} parent=1 // pred_region
      %24 = vsyncadd [#allocation6], 0
      %s25 = sshll.u32 %s1, 4
      %s26 = int_to_ptr.hbm [resolvable:$true] %s25
      %s27 = sshll.u32 [#allocation5], 4
      %s28 = int_to_ptr.vmem [resolvable:$true] %s27
      %33 = dma.hbm_to_vmem [thread:$0]  %s26, 8192, %s28, [#allocation6], 128, 128, 8
    $region9: #{tpu_custom_call.1} parent=1 // pred_fallthru
      _
    // Predicated region
    $region10: #{tpu_custom_call.1} parent=1 // pred_check
      _
    $region11: #{tpu_custom_call.1} parent=1 // pred_check_branch
      %35 = sbr.rel (0) target = $region13
    $region12: #{tpu_custom_call.1} parent=1 // pred_region
      %37 = dma.done [#allocation3], 16
    $region13: #{tpu_custom_call.1} parent=1 // pred_fallthru
      _
    // Predicated region
    $region14: #{tpu_custom_call.1} parent=1 // pred_check
      _
    $region15: #{tpu_custom_call.1} parent=1 // pred_check_branch
      %39 = sbr.rel (0) target = $region17
    $region16: #{tpu_custom_call.1} parent=1 // pred_region
      %41 = dma.done [#allocation6], 8192
    $region17: #{tpu_custom_call.1} parent=1 // pred_fallthru
      _
    %v42 = vld [vmem:[#allocation5] sm:$0xff]
    %v43 = vld [vmem:[#allocation5 + $0x8] sm:$0xff]
    %v44 = vld [vmem:[#allocation5 + $0x10] sm:$0xff]
    %v45 = vld [vmem:[#allocation5 + $0x18] sm:$0xff]
    %v46 = vld [vmem:[#allocation5 + $0x20] sm:$0xff]
    %v47 = vld [vmem:[#allocation5 + $0x28] sm:$0xff]
    %v48 = vld [vmem:[#allocation5 + $0x30] sm:$0xff]
    %v49 = vld [vmem:[#allocation5 + $0x38] sm:$0xff]
    %v50 = vld [vmem:[#allocation5 + $0x40] sm:$0xff]
    %v51 = vld [vmem:[#allocation5 + $0x48] sm:$0xff]
    %v52 = vld [vmem:[#allocation5 + $0x50] sm:$0xff]
    %v53 = vld [vmem:[#allocation5 + $0x58] sm:$0xff]
    %v54 = vld [vmem:[#allocation5 + $0x60] sm:$0xff]
    %v55 = vld [vmem:[#allocation5 + $0x68] sm:$0xff]
    %v56 = vld [vmem:[#allocation5 + $0x70] sm:$0xff]
    %v57 = vld [vmem:[#allocation5 + $0x78] sm:$0xff]
    %v58 = vld [vmem:[#allocation5 + $0x80] sm:$0xff]
    %v59 = vld [vmem:[#allocation5 + $0x88] sm:$0xff]
    %v60 = vld [vmem:[#allocation5 + $0x90] sm:$0xff]
    %v61 = vld [vmem:[#allocation5 + $0x98] sm:$0xff]
    %v62 = vld [vmem:[#allocation5 + $0xa0] sm:$0xff]
    %v63 = vld [vmem:[#allocation5 + $0xa8] sm:$0xff]
    %v64 = vld [vmem:[#allocation5 + $0xb0] sm:$0xff]
    %v65 = vld [vmem:[#allocation5 + $0xb8] sm:$0xff]
    %v66 = vld [vmem:[#allocation5 + $0xc0] sm:$0xff]
    %v67 = vld [vmem:[#allocation5 + $0xc8] sm:$0xff]
    %v68 = vld [vmem:[#allocation5 + $0xd0] sm:$0xff]
    %v69 = vld [vmem:[#allocation5 + $0xd8] sm:$0xff]
    %v70 = vld [vmem:[#allocation5 + $0xe0] sm:$0xff]
    %v71 = vld [vmem:[#allocation5 + $0xe8] sm:$0xff]
    %v72 = vld [vmem:[#allocation5 + $0xf0] sm:$0xff]
    %v73 = vld [vmem:[#allocation5 + $0xf8] sm:$0xff]
    %v74 = vld [vmem:[#allocation5 + $0x100] sm:$0xff]
    %v75 = vld [vmem:[#allocation5 + $0x108] sm:$0xff]
    %v76 = vld [vmem:[#allocation5 + $0x110] sm:$0xff]
    %v77 = vld [vmem:[#allocation5 + $0x118] sm:$0xff]
    %v78 = vld [vmem:[#allocation5 + $0x120] sm:$0xff]
    %v79 = vld [vmem:[#allocation5 + $0x128] sm:$0xff]
    %v80 = vld [vmem:[#allocation5 + $0x130] sm:$0xff]
    %v81 = vld [vmem:[#allocation5 + $0x138] sm:$0xff]
    %v82 = vld [vmem:[#allocation5 + $0x140] sm:$0xff]
    %v83 = vld [vmem:[#allocation5 + $0x148] sm:$0xff]
    %v84 = vld [vmem:[#allocation5 + $0x150] sm:$0xff]
    %v85 = vld [vmem:[#allocation5 + $0x158] sm:$0xff]
    %v86 = vld [vmem:[#allocation5 + $0x160] sm:$0xff]
    %v87 = vld [vmem:[#allocation5 + $0x168] sm:$0xff]
    %v88 = vld [vmem:[#allocation5 + $0x170] sm:$0xff]
    %v89 = vld [vmem:[#allocation5 + $0x178] sm:$0xff]
    %v90 = vld [vmem:[#allocation5 + $0x180] sm:$0xff]
    %v91 = vld [vmem:[#allocation5 + $0x188] sm:$0xff]
    %v92 = vld [vmem:[#allocation5 + $0x190] sm:$0xff]
    %v93 = vld [vmem:[#allocation5 + $0x198] sm:$0xff]
    %v94 = vld [vmem:[#allocation5 + $0x1a0] sm:$0xff]
    %v95 = vld [vmem:[#allocation5 + $0x1a8] sm:$0xff]
    %v96 = vld [vmem:[#allocation5 + $0x1b0] sm:$0xff]
    %v97 = vld [vmem:[#allocation5 + $0x1b8] sm:$0xff]
    %v98 = vld [vmem:[#allocation5 + $0x1c0] sm:$0xff]
    %v99 = vld [vmem:[#allocation5 + $0x1c8] sm:$0xff]
    %v100 = vld [vmem:[#allocation5 + $0x1d0] sm:$0xff]
    %v101 = vld [vmem:[#allocation5 + $0x1d8] sm:$0xff]
    %v102 = vld [vmem:[#allocation5 + $0x1e0] sm:$0xff]
    %v103 = vld [vmem:[#allocation5 + $0x1e8] sm:$0xff]
    %v104 = vld [vmem:[#allocation5 + $0x1f0] sm:$0xff]
    %v105 = vld [vmem:[#allocation5 + $0x1f8] sm:$0xff]
    %v106 = vld [vmem:[#allocation2] sm:$0x1]
    %v108 = vperm.slane %v106, 0
    %v110 = vadd.f32 %v42, %v108
    %v111 = vadd.f32 %v43, %v108
    %v112 = vadd.f32 %v44, %v108
    %v113 = vadd.f32 %v45, %v108
    %v114 = vadd.f32 %v46, %v108
    %v115 = vadd.f32 %v47, %v108
    %v116 = vadd.f32 %v48, %v108
    %v117 = vadd.f32 %v49, %v108
    %v118 = vadd.f32 %v50, %v108
    %v119 = vadd.f32 %v51, %v108
    %v120 = vadd.f32 %v52, %v108
    %v121 = vadd.f32 %v53, %v108
    %v122 = vadd.f32 %v54, %v108
    %v123 = vadd.f32 %v55, %v108
    %v124 = vadd.f32 %v56, %v108
    %v125 = vadd.f32 %v57, %v108
    %v126 = vadd.f32 %v58, %v108
    %v127 = vadd.f32 %v59, %v108
    %v128 = vadd.f32 %v60, %v108
    %v129 = vadd.f32 %v61, %v108
    %v130 = vadd.f32 %v62, %v108
    %v131 = vadd.f32 %v63, %v108
    %v132 = vadd.f32 %v64, %v108
    %v133 = vadd.f32 %v65, %v108
    %v134 = vadd.f32 %v66, %v108
    %v135 = vadd.f32 %v67, %v108
    %v136 = vadd.f32 %v68, %v108
    %v137 = vadd.f32 %v69, %v108
    %v138 = vadd.f32 %v70, %v108
    %v139 = vadd.f32 %v71, %v108
    %v140 = vadd.f32 %v72, %v108
    %v141 = vadd.f32 %v73, %v108
    %v142 = vadd.f32 %v74, %v108
    %v143 = vadd.f32 %v75, %v108
    %v144 = vadd.f32 %v76, %v108
    %v145 = vadd.f32 %v77, %v108
    %v146 = vadd.f32 %v78, %v108
    %v147 = vadd.f32 %v79, %v108
    %v148 = vadd.f32 %v80, %v108
    %v149 = vadd.f32 %v81, %v108
    %v150 = vadd.f32 %v82, %v108
    %v151 = vadd.f32 %v83, %v108
    %v152 = vadd.f32 %v84, %v108
    %v153 = vadd.f32 %v85, %v108
    %v154 = vadd.f32 %v86, %v108
    %v155 = vadd.f32 %v87, %v108
    %v156 = vadd.f32 %v88, %v108
    %v157 = vadd.f32 %v89, %v108
    %v158 = vadd.f32 %v90, %v108
    %v159 = vadd.f32 %v91, %v108
    %v160 = vadd.f32 %v92, %v108
    %v161 = vadd.f32 %v93, %v108
    %v162 = vadd.f32 %v94, %v108
    %v163 = vadd.f32 %v95, %v108
    %v164 = vadd.f32 %v96, %v108
    %v165 = vadd.f32 %v97, %v108
    %v166 = vadd.f32 %v98, %v108
    %v167 = vadd.f32 %v99, %v108
    %v168 = vadd.f32 %v100, %v108
    %v169 = vadd.f32 %v101, %v108
    %v170 = vadd.f32 %v102, %v108
    %v171 = vadd.f32 %v103, %v108
    %v172 = vadd.f32 %v104, %v108
    %v173 = vadd.f32 %v105, %v108
    %174 = vmax.xlane.f32.xlu0 %v110
    %v175 = vpop.xlane.xlu0 %174
    %176 = vmax.xlane.f32.xlu0 %v111
    %v177 = vpop.xlane.xlu0 %176
    %178 = vmax.xlane.f32.xlu0 %v112
    %v179 = vpop.xlane.xlu0 %178
    %180 = vmax.xlane.f32.xlu0 %v113
    %v181 = vpop.xlane.xlu0 %180
    %182 = vmax.xlane.f32.xlu0 %v114
    %v183 = vpop.xlane.xlu0 %182
    %184 = vmax.xlane.f32.xlu0 %v115
    %v185 = vpop.xlane.xlu0 %184
    %186 = vmax.xlane.f32.xlu0 %v116
    %v187 = vpop.xlane.xlu0 %186
    %188 = vmax.xlane.f32.xlu0 %v117
    %v189 = vpop.xlane.xlu0 %188
    %190 = vmax.xlane.f32.xlu0 %v118
    %v191 = vpop.xlane.xlu0 %190
    %192 = vmax.xlane.f32.xlu0 %v119
    %v193 = vpop.xlane.xlu0 %192
    %194 = vmax.xlane.f32.xlu0 %v120
    %v195 = vpop.xlane.xlu0 %194
    %196 = vmax.xlane.f32.xlu0 %v121
    %v197 = vpop.xlane.xlu0 %196
    %198 = vmax.xlane.f32.xlu0 %v122
    %v199 = vpop.xlane.xlu0 %198
    %200 = vmax.xlane.f32.xlu0 %v123
    %v201 = vpop.xlane.xlu0 %200
    %202 = vmax.xlane.f32.xlu0 %v124
    %v203 = vpop.xlane.xlu0 %202
    %204 = vmax.xlane.f32.xlu0 %v125
    %v205 = vpop.xlane.xlu0 %204
    %206 = vmax.xlane.f32.xlu0 %v126
    %v207 = vpop.xlane.xlu0 %206
    %208 = vmax.xlane.f32.xlu0 %v127
    %v209 = vpop.xlane.xlu0 %208
    %210 = vmax.xlane.f32.xlu0 %v128
    %v211 = vpop.xlane.xlu0 %210
    %212 = vmax.xlane.f32.xlu0 %v129
    %v213 = vpop.xlane.xlu0 %212
    %214 = vmax.xlane.f32.xlu0 %v130
    %v215 = vpop.xlane.xlu0 %214
    %216 = vmax.xlane.f32.xlu0 %v131
    %v217 = vpop.xlane.xlu0 %216
    %218 = vmax.xlane.f32.xlu0 %v132
    %v219 = vpop.xlane.xlu0 %218
    %220 = vmax.xlane.f32.xlu0 %v133
    %v221 = vpop.xlane.xlu0 %220
    %222 = vmax.xlane.f32.xlu0 %v134
    %v223 = vpop.xlane.xlu0 %222
    %224 = vmax.xlane.f32.xlu0 %v135
    %v225 = vpop.xlane.xlu0 %224
    %226 = vmax.xlane.f32.xlu0 %v136
    %v227 = vpop.xlane.xlu0 %226
    %228 = vmax.xlane.f32.xlu0 %v137
    %v229 = vpop.xlane.xlu0 %228
    %230 = vmax.xlane.f32.xlu0 %v138
    %v231 = vpop.xlane.xlu0 %230
    %232 = vmax.xlane.f32.xlu0 %v139
    %v233 = vpop.xlane.xlu0 %232
    %234 = vmax.xlane.f32.xlu0 %v140
    %v235 = vpop.xlane.xlu0 %234
    %236 = vmax.xlane.f32.xlu0 %v141
    %v237 = vpop.xlane.xlu0 %236
    %238 = vmax.xlane.f32.xlu0 %v142
    %v239 = vpop.xlane.xlu0 %238
    %240 = vmax.xlane.f32.xlu0 %v143
    %v241 = vpop.xlane.xlu0 %240
    %242 = vmax.xlane.f32.xlu0 %v144
    %v243 = vpop.xlane.xlu0 %242
    %244 = vmax.xlane.f32.xlu0 %v145
    %v245 = vpop.xlane.xlu0 %244
    %246 = vmax.xlane.f32.xlu0 %v146
    %v247 = vpop.xlane.xlu0 %246
    %248 = vmax.xlane.f32.xlu0 %v147
    %v249 = vpop.xlane.xlu0 %248
    %250 = vmax.xlane.f32.xlu0 %v148
    %v251 = vpop.xlane.xlu0 %250
    %252 = vmax.xlane.f32.xlu0 %v149
    %v253 = vpop.xlane.xlu0 %252
    %254 = vmax.xlane.f32.xlu0 %v150
    %v255 = vpop.xlane.xlu0 %254
    %256 = vmax.xlane.f32.xlu0 %v151
    %v257 = vpop.xlane.xlu0 %256
    %258 = vmax.xlane.f32.xlu0 %v152
    %v259 = vpop.xlane.xlu0 %258
    %260 = vmax.xlane.f32.xlu0 %v153
    %v261 = vpop.xlane.xlu0 %260
    %262 = vmax.xlane.f32.xlu0 %v154
    %v263 = vpop.xlane.xlu0 %262
    %264 = vmax.xlane.f32.xlu0 %v155
    %v265 = vpop.xlane.xlu0 %264
    %266 = vmax.xlane.f32.xlu0 %v156
    %v267 = vpop.xlane.xlu0 %266
    %268 = vmax.xlane.f32.xlu0 %v157
    %v269 = vpop.xlane.xlu0 %268
    %270 = vmax.xlane.f32.xlu0 %v158
    %v271 = vpop.xlane.xlu0 %270
    %272 = vmax.xlane.f32.xlu0 %v159
    %v273 = vpop.xlane.xlu0 %272
    %274 = vmax.xlane.f32.xlu0 %v160
    %v275 = vpop.xlane.xlu0 %274
    %276 = vmax.xlane.f32.xlu0 %v161
    %v277 = vpop.xlane.xlu0 %276
    %278 = vmax.xlane.f32.xlu0 %v162
    %v279 = vpop.xlane.xlu0 %278
    %280 = vmax.xlane.f32.xlu0 %v163
    %v281 = vpop.xlane.xlu0 %280
    %282 = vmax.xlane.f32.xlu0 %v164
    %v283 = vpop.xlane.xlu0 %282
    %284 = vmax.xlane.f32.xlu0 %v165
    %v285 = vpop.xlane.xlu0 %284
    %286 = vmax.xlane.f32.xlu0 %v166
    %v287 = vpop.xlane.xlu0 %286
    %288 = vmax.xlane.f32.xlu0 %v167
    %v289 = vpop.xlane.xlu0 %288
    %290 = vmax.xlane.f32.xlu0 %v168
    %v291 = vpop.xlane.xlu0 %290
    %292 = vmax.xlane.f32.xlu0 %v169
    %v293 = vpop.xlane.xlu0 %292
    %294 = vmax.xlane.f32.xlu0 %v170
    %v295 = vpop.xlane.xlu0 %294
    %296 = vmax.xlane.f32.xlu0 %v171
    %v297 = vpop.xlane.xlu0 %296
    %298 = vmax.xlane.f32.xlu0 %v172
    %v299 = vpop.xlane.xlu0 %298
    %300 = vmax.xlane.f32.xlu0 %v173
    %v301 = vpop.xlane.xlu0 %300
    %v302 = vsub.f32 %v110, %v175
    %v303 = vsub.f32 %v111, %v177
    %v304 = vsub.f32 %v112, %v179
    %v305 = vsub.f32 %v113, %v181
    %v306 = vsub.f32 %v114, %v183
    %v307 = vsub.f32 %v115, %v185
    %v308 = vsub.f32 %v116, %v187
    %v309 = vsub.f32 %v117, %v189
    %v310 = vsub.f32 %v118, %v191
    %v311 = vsub.f32 %v119, %v193
    %v312 = vsub.f32 %v120, %v195
    %v313 = vsub.f32 %v121, %v197
    %v314 = vsub.f32 %v122, %v199
    %v315 = vsub.f32 %v123, %v201
    %v316 = vsub.f32 %v124, %v203
    %v317 = vsub.f32 %v125, %v205
    %v318 = vsub.f32 %v126, %v207
    %v319 = vsub.f32 %v127, %v209
    %v320 = vsub.f32 %v128, %v211
    %v321 = vsub.f32 %v129, %v213
    %v322 = vsub.f32 %v130, %v215
    %v323 = vsub.f32 %v131, %v217
    %v324 = vsub.f32 %v132, %v219
    %v325 = vsub.f32 %v133, %v221
    %v326 = vsub.f32 %v134, %v223
    %v327 = vsub.f32 %v135, %v225
    %v328 = vsub.f32 %v136, %v227
    %v329 = vsub.f32 %v137, %v229
    %v330 = vsub.f32 %v138, %v231
    %v331 = vsub.f32 %v139, %v233
    %v332 = vsub.f32 %v140, %v235
    %v333 = vsub.f32 %v141, %v237
    %v334 = vsub.f32 %v142, %v239
    %v335 = vsub.f32 %v143, %v241
    %v336 = vsub.f32 %v144, %v243
    %v337 = vsub.f32 %v145, %v245
    %v338 = vsub.f32 %v146, %v247
    %v339 = vsub.f32 %v147, %v249
    %v340 = vsub.f32 %v148, %v251
    %v341 = vsub.f32 %v149, %v253
    %v342 = vsub.f32 %v150, %v255
    %v343 = vsub.f32 %v151, %v257
    %v344 = vsub.f32 %v152, %v259
    %v345 = vsub.f32 %v153, %v261
    %v346 = vsub.f32 %v154, %v263
    %v347 = vsub.f32 %v155, %v265
    %v348 = vsub.f32 %v156, %v267
    %v349 = vsub.f32 %v157, %v269
    %v350 = vsub.f32 %v158, %v271
    %v351 = vsub.f32 %v159, %v273
    %v352 = vsub.f32 %v160, %v275
    %v353 = vsub.f32 %v161, %v277
    %v354 = vsub.f32 %v162, %v279
    %v355 = vsub.f32 %v163, %v281
    %v356 = vsub.f32 %v164, %v283
    %v357 = vsub.f32 %v165, %v285
    %v358 = vsub.f32 %v166, %v287
    %v359 = vsub.f32 %v167, %v289
    %v360 = vsub.f32 %v168, %v291
    %v361 = vsub.f32 %v169, %v293
    %v362 = vsub.f32 %v170, %v295
    %v363 = vsub.f32 %v171, %v297
    %v364 = vsub.f32 %v172, %v299
    %v365 = vsub.f32 %v173, %v301
    %v366 = vmul.f32 %v302, 1.442695
    %v367 = vpow.pop %v366
    %v368 = vmul.f32 %v303, 1.442695
    %v369 = vpow.pop %v368
    %v370 = vmul.f32 %v304, 1.442695
    %v371 = vpow.pop %v370
    %v372 = vmul.f32 %v305, 1.442695
    %v373 = vpow.pop %v372
    %v374 = vmul.f32 %v306, 1.442695
    %v375 = vpow.pop %v374
    %v376 = vmul.f32 %v307, 1.442695
    %v377 = vpow.pop %v376
    %v378 = vmul.f32 %v308, 1.442695
    %v379 = vpow.pop %v378
    %v380 = vmul.f32 %v309, 1.442695
    %v381 = vpow.pop %v380
    %v382 = vmul.f32 %v310, 1.442695
    %v383 = vpow.pop %v382
    %v384 = vmul.f32 %v311, 1.442695
    %v385 = vpow.pop %v384
    %v386 = vmul.f32 %v312, 1.442695
    %v387 = vpow.pop %v386
    %v388 = vmul.f32 %v313, 1.442695
    %v389 = vpow.pop %v388
    %v390 = vmul.f32 %v314, 1.442695
    %v391 = vpow.pop %v390
    %v392 = vmul.f32 %v315, 1.442695
    %v393 = vpow.pop %v392
    %v394 = vmul.f32 %v316, 1.442695
    %v395 = vpow.pop %v394
    %v396 = vmul.f32 %v317, 1.442695
    %v397 = vpow.pop %v396
    %v398 = vmul.f32 %v318, 1.442695
    %v399 = vpow.pop %v398
    %v400 = vmul.f32 %v319, 1.442695
    %v401 = vpow.pop %v400
    %v402 = vmul.f32 %v320, 1.442695
    %v403 = vpow.pop %v402
    %v404 = vmul.f32 %v321, 1.442695
    %v405 = vpow.pop %v404
    %v406 = vmul.f32 %v322, 1.442695
    %v407 = vpow.pop %v406
    %v408 = vmul.f32 %v323, 1.442695
    %v409 = vpow.pop %v408
    %v410 = vmul.f32 %v324, 1.442695
    %v411 = vpow.pop %v410
    %v412 = vmul.f32 %v325, 1.442695
    %v413 = vpow.pop %v412
    %v414 = vmul.f32 %v326, 1.442695
    %v415 = vpow.pop %v414
    %v416 = vmul.f32 %v327, 1.442695
    %v417 = vpow.pop %v416
    %v418 = vmul.f32 %v328, 1.442695
    %v419 = vpow.pop %v418
    %v420 = vmul.f32 %v329, 1.442695
    %v421 = vpow.pop %v420
    %v422 = vmul.f32 %v330, 1.442695
    %v423 = vpow.pop %v422
    %v424 = vmul.f32 %v331, 1.442695
    %v425 = vpow.pop %v424
    %v426 = vmul.f32 %v332, 1.442695
    %v427 = vpow.pop %v426
    %v428 = vmul.f32 %v333, 1.442695
    %v429 = vpow.pop %v428
    %v430 = vmul.f32 %v334, 1.442695
    %v431 = vpow.pop %v430
    %v432 = vmul.f32 %v335, 1.442695
    %v433 = vpow.pop %v432
    %v434 = vmul.f32 %v336, 1.442695
    %v435 = vpow.pop %v434
    %v436 = vmul.f32 %v337, 1.442695
    %v437 = vpow.pop %v436
    %v438 = vmul.f32 %v338, 1.442695
    %v439 = vpow.pop %v438
    %v440 = vmul.f32 %v339, 1.442695
    %v441 = vpow.pop %v440
    %v442 = vmul.f32 %v340, 1.442695
    %v443 = vpow.pop %v442
    %v444 = vmul.f32 %v341, 1.442695
    %v445 = vpow.pop %v444
    %v446 = vmul.f32 %v342, 1.442695
    %v447 = vpow.pop %v446
    %v448 = vmul.f32 %v343, 1.442695
    %v449 = vpow.pop %v448
    %v450 = vmul.f32 %v344, 1.442695
    %v451 = vpow.pop %v450
    %v452 = vmul.f32 %v345, 1.442695
    %v453 = vpow.pop %v452
    %v454 = vmul.f32 %v346, 1.442695
    %v455 = vpow.pop %v454
    %v456 = vmul.f32 %v347, 1.442695
    %v457 = vpow.pop %v456
    %v458 = vmul.f32 %v348, 1.442695
    %v459 = vpow.pop %v458
    %v460 = vmul.f32 %v349, 1.442695
    %v461 = vpow.pop %v460
    %v462 = vmul.f32 %v350, 1.442695
    %v463 = vpow.pop %v462
    %v464 = vmul.f32 %v351, 1.442695
    %v465 = vpow.pop %v464
    %v466 = vmul.f32 %v352, 1.442695
    %v467 = vpow.pop %v466
    %v468 = vmul.f32 %v353, 1.442695
    %v469 = vpow.pop %v468
    %v470 = vmul.f32 %v354, 1.442695
    %v471 = vpow.pop %v470
    %v472 = vmul.f32 %v355, 1.442695
    %v473 = vpow.pop %v472
    %v474 = vmul.f32 %v356, 1.442695
    %v475 = vpow.pop %v474
    %v476 = vmul.f32 %v357, 1.442695
    %v477 = vpow.pop %v476
    %v478 = vmul.f32 %v358, 1.442695
    %v479 = vpow.pop %v478
    %v480 = vmul.f32 %v359, 1.442695
    %v481 = vpow.pop %v480
    %v482 = vmul.f32 %v360, 1.442695
    %v483 = vpow.pop %v482
    %v484 = vmul.f32 %v361, 1.442695
    %v485 = vpow.pop %v484
    %v486 = vmul.f32 %v362, 1.442695
    %v487 = vpow.pop %v486
    %v488 = vmul.f32 %v363, 1.442695
    %v489 = vpow.pop %v488
    %v490 = vmul.f32 %v364, 1.442695
    %v491 = vpow.pop %v490
    %v492 = vmul.f32 %v365, 1.442695
    %v493 = vpow.pop %v492
    %494 = vadd.xlane.f32.xlu0 %v367
    %v495 = vpop.xlane.xlu0 %494
    %496 = vadd.xlane.f32.xlu0 %v369
    %v497 = vpop.xlane.xlu0 %496
    %498 = vadd.xlane.f32.xlu0 %v371
    %v499 = vpop.xlane.xlu0 %498
    %500 = vadd.xlane.f32.xlu0 %v373
    %v501 = vpop.xlane.xlu0 %500
    %502 = vadd.xlane.f32.xlu0 %v375
    %v503 = vpop.xlane.xlu0 %502
    %504 = vadd.xlane.f32.xlu0 %v377
    %v505 = vpop.xlane.xlu0 %504
    %506 = vadd.xlane.f32.xlu0 %v379
    %v507 = vpop.xlane.xlu0 %506
    %508 = vadd.xlane.f32.xlu0 %v381
    %v509 = vpop.xlane.xlu0 %508
    %510 = vadd.xlane.f32.xlu0 %v383
    %v511 = vpop.xlane.xlu0 %510
    %512 = vadd.xlane.f32.xlu0 %v385
    %v513 = vpop.xlane.xlu0 %512
    %514 = vadd.xlane.f32.xlu0 %v387
    %v515 = vpop.xlane.xlu0 %514
    %516 = vadd.xlane.f32.xlu0 %v389
    %v517 = vpop.xlane.xlu0 %516
    %518 = vadd.xlane.f32.xlu0 %v391
    %v519 = vpop.xlane.xlu0 %518
    %520 = vadd.xlane.f32.xlu0 %v393
    %v521 = vpop.xlane.xlu0 %520
    %522 = vadd.xlane.f32.xlu0 %v395
    %v523 = vpop.xlane.xlu0 %522
    %524 = vadd.xlane.f32.xlu0 %v397
    %v525 = vpop.xlane.xlu0 %524
    %526 = vadd.xlane.f32.xlu0 %v399
    %v527 = vpop.xlane.xlu0 %526
    %528 = vadd.xlane.f32.xlu0 %v401
    %v529 = vpop.xlane.xlu0 %528
    %530 = vadd.xlane.f32.xlu0 %v403
    %v531 = vpop.xlane.xlu0 %530
    %532 = vadd.xlane.f32.xlu0 %v405
    %v533 = vpop.xlane.xlu0 %532
    %534 = vadd.xlane.f32.xlu0 %v407
    %v535 = vpop.xlane.xlu0 %534
    %536 = vadd.xlane.f32.xlu0 %v409
    %v537 = vpop.xlane.xlu0 %536
    %538 = vadd.xlane.f32.xlu0 %v411
    %v539 = vpop.xlane.xlu0 %538
    %540 = vadd.xlane.f32.xlu0 %v413
    %v541 = vpop.xlane.xlu0 %540
    %542 = vadd.xlane.f32.xlu0 %v415
    %v543 = vpop.xlane.xlu0 %542
    %544 = vadd.xlane.f32.xlu0 %v417
    %v545 = vpop.xlane.xlu0 %544
    %546 = vadd.xlane.f32.xlu0 %v419
    %v547 = vpop.xlane.xlu0 %546
    %548 = vadd.xlane.f32.xlu0 %v421
    %v549 = vpop.xlane.xlu0 %548
    %550 = vadd.xlane.f32.xlu0 %v423
    %v551 = vpop.xlane.xlu0 %550
    %552 = vadd.xlane.f32.xlu0 %v425
    %v553 = vpop.xlane.xlu0 %552
    %554 = vadd.xlane.f32.xlu0 %v427
    %v555 = vpop.xlane.xlu0 %554
    %556 = vadd.xlane.f32.xlu0 %v429
    %v557 = vpop.xlane.xlu0 %556
    %558 = vadd.xlane.f32.xlu0 %v431
    %v559 = vpop.xlane.xlu0 %558
    %560 = vadd.xlane.f32.xlu0 %v433
    %v561 = vpop.xlane.xlu0 %560
    %562 = vadd.xlane.f32.xlu0 %v435
    %v563 = vpop.xlane.xlu0 %562
    %564 = vadd.xlane.f32.xlu0 %v437
    %v565 = vpop.xlane.xlu0 %564
    %566 = vadd.xlane.f32.xlu0 %v439
    %v567 = vpop.xlane.xlu0 %566
    %568 = vadd.xlane.f32.xlu0 %v441
    %v569 = vpop.xlane.xlu0 %568
    %570 = vadd.xlane.f32.xlu0 %v443
    %v571 = vpop.xlane.xlu0 %570
    %572 = vadd.xlane.f32.xlu0 %v445
    %v573 = vpop.xlane.xlu0 %572
    %574 = vadd.xlane.f32.xlu0 %v447
    %v575 = vpop.xlane.xlu0 %574
    %576 = vadd.xlane.f32.xlu0 %v449
    %v577 = vpop.xlane.xlu0 %576
    %578 = vadd.xlane.f32.xlu0 %v451
    %v579 = vpop.xlane.xlu0 %578
    %580 = vadd.xlane.f32.xlu0 %v453
    %v581 = vpop.xlane.xlu0 %580
    %582 = vadd.xlane.f32.xlu0 %v455
    %v583 = vpop.xlane.xlu0 %582
    %584 = vadd.xlane.f32.xlu0 %v457
    %v585 = vpop.xlane.xlu0 %584
    %586 = vadd.xlane.f32.xlu0 %v459
    %v587 = vpop.xlane.xlu0 %586
    %588 = vadd.xlane.f32.xlu0 %v461
    %v589 = vpop.xlane.xlu0 %588
    %590 = vadd.xlane.f32.xlu0 %v463
    %v591 = vpop.xlane.xlu0 %590
    %592 = vadd.xlane.f32.xlu0 %v465
    %v593 = vpop.xlane.xlu0 %592
    %594 = vadd.xlane.f32.xlu0 %v467
    %v595 = vpop.xlane.xlu0 %594
    %596 = vadd.xlane.f32.xlu0 %v469
    %v597 = vpop.xlane.xlu0 %596
    %598 = vadd.xlane.f32.xlu0 %v471
    %v599 = vpop.xlane.xlu0 %598
    %600 = vadd.xlane.f32.xlu0 %v473
    %v601 = vpop.xlane.xlu0 %600
    %602 = vadd.xlane.f32.xlu0 %v475
    %v603 = vpop.xlane.xlu0 %602
    %604 = vadd.xlane.f32.xlu0 %v477
    %v605 = vpop.xlane.xlu0 %604
    %606 = vadd.xlane.f32.xlu0 %v479
    %v607 = vpop.xlane.xlu0 %606
    %608 = vadd.xlane.f32.xlu0 %v481
    %v609 = vpop.xlane.xlu0 %608
    %610 = vadd.xlane.f32.xlu0 %v483
    %v611 = vpop.xlane.xlu0 %610
    %612 = vadd.xlane.f32.xlu0 %v485
    %v613 = vpop.xlane.xlu0 %612
    %614 = vadd.xlane.f32.xlu0 %v487
    %v615 = vpop.xlane.xlu0 %614
    %616 = vadd.xlane.f32.xlu0 %v489
    %v617 = vpop.xlane.xlu0 %616
    %618 = vadd.xlane.f32.xlu0 %v491
    %v619 = vpop.xlane.xlu0 %618
    %620 = vadd.xlane.f32.xlu0 %v493
    %v621 = vpop.xlane.xlu0 %620
    %v622 = vrcp.pop %v495
    %v623 = vrcp.pop %v497
    %v624 = vrcp.pop %v499
    %v625 = vrcp.pop %v501
    %v626 = vrcp.pop %v503
    %v627 = vrcp.pop %v505
    %v628 = vrcp.pop %v507
    %v629 = vrcp.pop %v509
    %v630 = vrcp.pop %v511
    %v631 = vrcp.pop %v513
    %v632 = vrcp.pop %v515
    %v633 = vrcp.pop %v517
    %v634 = vrcp.pop %v519
    %v635 = vrcp.pop %v521
    %v636 = vrcp.pop %v523
    %v637 = vrcp.pop %v525
    %v638 = vrcp.pop %v527
    %v639 = vrcp.pop %v529
    %v640 = vrcp.pop %v531
    %v641 = vrcp.pop %v533
    %v642 = vrcp.pop %v535
    %v643 = vrcp.pop %v537
    %v644 = vrcp.pop %v539
    %v645 = vrcp.pop %v541
    %v646 = vrcp.pop %v543
    %v647 = vrcp.pop %v545
    %v648 = vrcp.pop %v547
    %v649 = vrcp.pop %v549
    %v650 = vrcp.pop %v551
    %v651 = vrcp.pop %v553
    %v652 = vrcp.pop %v555
    %v653 = vrcp.pop %v557
    %v654 = vrcp.pop %v559
    %v655 = vrcp.pop %v561
    %v656 = vrcp.pop %v563
    %v657 = vrcp.pop %v565
    %v658 = vrcp.pop %v567
    %v659 = vrcp.pop %v569
    %v660 = vrcp.pop %v571
    %v661 = vrcp.pop %v573
    %v662 = vrcp.pop %v575
    %v663 = vrcp.pop %v577
    %v664 = vrcp.pop %v579
    %v665 = vrcp.pop %v581
    %v666 = vrcp.pop %v583
    %v667 = vrcp.pop %v585
    %v668 = vrcp.pop %v587
    %v669 = vrcp.pop %v589
    %v670 = vrcp.pop %v591
    %v671 = vrcp.pop %v593
    %v672 = vrcp.pop %v595
    %v673 = vrcp.pop %v597
    %v674 = vrcp.pop %v599
    %v675 = vrcp.pop %v601
    %v676 = vrcp.pop %v603
    %v677 = vrcp.pop %v605
    %v678 = vrcp.pop %v607
    %v679 = vrcp.pop %v609
    %v680 = vrcp.pop %v611
    %v681 = vrcp.pop %v613
    %v682 = vrcp.pop %v615
    %v683 = vrcp.pop %v617
    %v684 = vrcp.pop %v619
    %v685 = vrcp.pop %v621
    %v686 = vmul.f32 %v367, %v622
    %v687 = vmul.f32 %v369, %v623
    %v688 = vmul.f32 %v371, %v624
    %v689 = vmul.f32 %v373, %v625
    %v690 = vmul.f32 %v375, %v626
    %v691 = vmul.f32 %v377, %v627
    %v692 = vmul.f32 %v379, %v628
    %v693 = vmul.f32 %v381, %v629
    %v694 = vmul.f32 %v383, %v630
    %v695 = vmul.f32 %v385, %v631
    %v696 = vmul.f32 %v387, %v632
    %v697 = vmul.f32 %v389, %v633
    %v698 = vmul.f32 %v391, %v634
    %v699 = vmul.f32 %v393, %v635
    %v700 = vmul.f32 %v395, %v636
    %v701 = vmul.f32 %v397, %v637
    %v702 = vmul.f32 %v399, %v638
    %v703 = vmul.f32 %v401, %v639
    %v704 = vmul.f32 %v403, %v640
    %v705 = vmul.f32 %v405, %v641
    %v706 = vmul.f32 %v407, %v642
    %v707 = vmul.f32 %v409, %v643
    %v708 = vmul.f32 %v411, %v644
    %v709 = vmul.f32 %v413, %v645
    %v710 = vmul.f32 %v415, %v646
    %v711 = vmul.f32 %v417, %v647
    %v712 = vmul.f32 %v419, %v648
    %v713 = vmul.f32 %v421, %v649
    %v714 = vmul.f32 %v423, %v650
    %v715 = vmul.f32 %v425, %v651
    %v716 = vmul.f32 %v427, %v652
    %v717 = vmul.f32 %v429, %v653
    %v718 = vmul.f32 %v431, %v654
    %v719 = vmul.f32 %v433, %v655
    %v720 = vmul.f32 %v435, %v656
    %v721 = vmul.f32 %v437, %v657
    %v722 = vmul.f32 %v439, %v658
    %v723 = vmul.f32 %v441, %v659
    %v724 = vmul.f32 %v443, %v660
    %v725 = vmul.f32 %v445, %v661
    %v726 = vmul.f32 %v447, %v662
    %v727 = vmul.f32 %v449, %v663
    %v728 = vmul.f32 %v451, %v664
    %v729 = vmul.f32 %v453, %v665
    %v730 = vmul.f32 %v455, %v666
    %v731 = vmul.f32 %v457, %v667
    %v732 = vmul.f32 %v459, %v668
    %v733 = vmul.f32 %v461, %v669
    %v734 = vmul.f32 %v463, %v670
    %v735 = vmul.f32 %v465, %v671
    %v736 = vmul.f32 %v467, %v672
    %v737 = vmul.f32 %v469, %v673
    %v738 = vmul.f32 %v471, %v674
    %v739 = vmul.f32 %v473, %v675
    %v740 = vmul.f32 %v475, %v676
    %v741 = vmul.f32 %v477, %v677
    %v742 = vmul.f32 %v479, %v678
    %v743 = vmul.f32 %v481, %v679
    %v744 = vmul.f32 %v483, %v680
    %v745 = vmul.f32 %v485, %v681
    %v746 = vmul.f32 %v487, %v682
    %v747 = vmul.f32 %v489, %v683
    %v748 = vmul.f32 %v491, %v684
    %v749 = vmul.f32 %v493, %v685
    %750 = vst [vmem:[#allocation7] sm:$0xff] %v686
    %751 = vst [vmem:[#allocation7 + $0x8] sm:$0xff] %v687
    %752 = vst [vmem:[#allocation7 + $0x10] sm:$0xff] %v688
    %753 = vst [vmem:[#allocation7 + $0x18] sm:$0xff] %v689
    %754 = vst [vmem:[#allocation7 + $0x20] sm:$0xff] %v690
    %755 = vst [vmem:[#allocation7 + $0x28] sm:$0xff] %v691
    %756 = vst [vmem:[#allocation7 + $0x30] sm:$0xff] %v692
    %757 = vst [vmem:[#allocation7 + $0x38] sm:$0xff] %v693
    %758 = vst [vmem:[#allocation7 + $0x40] sm:$0xff] %v694
    %759 = vst [vmem:[#allocation7 + $0x48] sm:$0xff] %v695
    %760 = vst [vmem:[#allocation7 + $0x50] sm:$0xff] %v696
    %761 = vst [vmem:[#allocation7 + $0x58] sm:$0xff] %v697
    %762 = vst [vmem:[#allocation7 + $0x60] sm:$0xff] %v698
    %763 = vst [vmem:[#allocation7 + $0x68] sm:$0xff] %v699
    %764 = vst [vmem:[#allocation7 + $0x70] sm:$0xff] %v700
    %765 = vst [vmem:[#allocation7 + $0x78] sm:$0xff] %v701
    %766 = vst [vmem:[#allocation7 + $0x80] sm:$0xff] %v702
    %767 = vst [vmem:[#allocation7 + $0x88] sm:$0xff] %v703
    %768 = vst [vmem:[#allocation7 + $0x90] sm:$0xff] %v704
    %769 = vst [vmem:[#allocation7 + $0x98] sm:$0xff] %v705
    %770 = vst [vmem:[#allocation7 + $0xa0] sm:$0xff] %v706
    %771 = vst [vmem:[#allocation7 + $0xa8] sm:$0xff] %v707
    %772 = vst [vmem:[#allocation7 + $0xb0] sm:$0xff] %v708
    %773 = vst [vmem:[#allocation7 + $0xb8] sm:$0xff] %v709
    %774 = vst [vmem:[#allocation7 + $0xc0] sm:$0xff] %v710
    %775 = vst [vmem:[#allocation7 + $0xc8] sm:$0xff] %v711
    %776 = vst [vmem:[#allocation7 + $0xd0] sm:$0xff] %v712
    %777 = vst [vmem:[#allocation7 + $0xd8] sm:$0xff] %v713
    %778 = vst [vmem:[#allocation7 + $0xe0] sm:$0xff] %v714
    %779 = vst [vmem:[#allocation7 + $0xe8] sm:$0xff] %v715
    %780 = vst [vmem:[#allocation7 + $0xf0] sm:$0xff] %v716
    %781 = vst [vmem:[#allocation7 + $0xf8] sm:$0xff] %v717
    %782 = vst [vmem:[#allocation7 + $0x100] sm:$0xff] %v718
    %783 = vst [vmem:[#allocation7 + $0x108] sm:$0xff] %v719
    %784 = vst [vmem:[#allocation7 + $0x110] sm:$0xff] %v720
    %785 = vst [vmem:[#allocation7 + $0x118] sm:$0xff] %v721
    %786 = vst [vmem:[#allocation7 + $0x120] sm:$0xff] %v722
    %787 = vst [vmem:[#allocation7 + $0x128] sm:$0xff] %v723
    %788 = vst [vmem:[#allocation7 + $0x130] sm:$0xff] %v724
    %789 = vst [vmem:[#allocation7 + $0x138] sm:$0xff] %v725
    %790 = vst [vmem:[#allocation7 + $0x140] sm:$0xff] %v726
    %791 = vst [vmem:[#allocation7 + $0x148] sm:$0xff] %v727
    %792 = vst [vmem:[#allocation7 + $0x150] sm:$0xff] %v728
    %793 = vst [vmem:[#allocation7 + $0x158] sm:$0xff] %v729
    %794 = vst [vmem:[#allocation7 + $0x160] sm:$0xff] %v730
    %795 = vst [vmem:[#allocation7 + $0x168] sm:$0xff] %v731
    %796 = vst [vmem:[#allocation7 + $0x170] sm:$0xff] %v732
    %797 = vst [vmem:[#allocation7 + $0x178] sm:$0xff] %v733
    %798 = vst [vmem:[#allocation7 + $0x180] sm:$0xff] %v734
    %799 = vst [vmem:[#allocation7 + $0x188] sm:$0xff] %v735
    %800 = vst [vmem:[#allocation7 + $0x190] sm:$0xff] %v736
    %801 = vst [vmem:[#allocation7 + $0x198] sm:$0xff] %v737
    %802 = vst [vmem:[#allocation7 + $0x1a0] sm:$0xff] %v738
    %803 = vst [vmem:[#allocation7 + $0x1a8] sm:$0xff] %v739
    %804 = vst [vmem:[#allocation7 + $0x1b0] sm:$0xff] %v740
    %805 = vst [vmem:[#allocation7 + $0x1b8] sm:$0xff] %v741
    %806 = vst [vmem:[#allocation7 + $0x1c0] sm:$0xff] %v742
    %807 = vst [vmem:[#allocation7 + $0x1c8] sm:$0xff] %v743
    %808 = vst [vmem:[#allocation7 + $0x1d0] sm:$0xff] %v744
    %809 = vst [vmem:[#allocation7 + $0x1d8] sm:$0xff] %v745
    %810 = vst [vmem:[#allocation7 + $0x1e0] sm:$0xff] %v746
    %811 = vst [vmem:[#allocation7 + $0x1e8] sm:$0xff] %v747
    %812 = vst [vmem:[#allocation7 + $0x1f0] sm:$0xff] %v748
    %813 = vst [vmem:[#allocation7 + $0x1f8] sm:$0xff] %v749
    // Predicated region
    $region18: #{tpu_custom_call.1} parent=1 // pred_check
      _
    $region19: #{tpu_custom_call.1} parent=1 // pred_check_branch
      %815 = sbr.rel (0) target = $region21
    $region20: #{tpu_custom_call.1} parent=1 // pred_region
      %817 = vsyncadd [#allocation4], 0
      %s818 = sshll.u32 [#allocation7], 4
      %s819 = int_to_ptr.vmem [resolvable:$true] %s818
      %s820 = sshll.u32 %s2, 4
      %s821 = int_to_ptr.hbm [resolvable:$true] %s820
      %826 = dma.vmem_to_hbm [thread:$0]  %s819, 8192, %s821, [#allocation4], 128, 128, 8
    $region21: #{tpu_custom_call.1} parent=1 // pred_fallthru
      _
    // Predicated region
    $region22: #{tpu_custom_call.1} parent=1 // pred_check
      _
    $region23: #{tpu_custom_call.1} parent=1 // pred_check_branch
      %828 = sbr.rel (0) target = $region25
    $region24: #{tpu_custom_call.1} parent=1 // pred_region
      %830 = dma.done [#allocation4], 8192
    $region25: #{tpu_custom_call.1} parent=1 // pred_fallthru
      _
    %831 = vsyncpa [#allocation3], 1
    %832 = vsyncpa [#allocation6], 1
    %833 = vsyncpa [#allocation4], 1

</llo_original>
